<compile_context>
chip_gen: v7x
topology: tpu7x:2x2x1
jax: 0.10.0
libtpu: 0.0.40
codegen_flags: <defaults>
</compile_context>

<pallas_src>
import functools
import math

import jax
import jax.numpy as jnp
from jax.experimental import pallas as pl
from jax.experimental.pallas import tpu as pltpu

_NEG_SENT = -1.0e37   # small enough that ||a||^2 + 2*sentinel never overflows f32
_POS_SENT = 1.0e37


def _triplet_kernel(xa_ref, xbt_ref, sqa_ref, ta_ref, hsqb_ref, lab_ref,
                    hinge_ref, pmax_ref, nmin_ref, *, margin):
    """One (anchor-tile i, candidate-tile j) grid step.

    xa_ref   : (tm, D)   anchor features (bf16 or f32)
    xbt_ref  : (D, tn)   candidate features, pre-transposed
    sqa_ref  : (tm, 1)   anchor ||x||^2 (f32)
    ta_ref   : (tm, 1)   anchor labels (i32)
    hsqb_ref : (n_pad//128, 128) resident candidate 0.5*||x||^2 (+1e37 on pads)
    lab_ref  : (n_pad//128, 128) resident candidate labels (pad label never matches)
    hinge_ref: (tm, 1)   per-anchor hinge, written only in the finalize branch
    pmax_ref / nmin_ref : (tm, 128) lane-dense running mining scratch
    """
    j = pl.program_id(1)

    @pl.when(j == 0)
    def _init():
        pmax_ref[...] = jnp.full(pmax_ref.shape, _NEG_SENT, jnp.float32)
        nmin_ref[...] = jnp.full(nmin_ref.shape, _POS_SENT, jnp.float32)

    # (tm, tn) Gram tile on the MXU; canonical (M,K)x(K,N) contraction, f32 acc.
    gram = jax.lax.dot_general(
        xa_ref[...], xbt_ref[...],
        dimension_numbers=(((1,), (0,)), ((), ())),
        preferred_element_type=jnp.float32)

    tn = xbt_ref.shape[1]
    groups = tn // 128            # lane groups per candidate tile (1 or 2)
    base = j * groups             # row into the resident (n_pad//128, 128) tables
    ta = ta_ref[...]              # (tm, 1) i32

    pm = None
    nm = None
    for g in range(groups):
        col = gram[:, g * 128:(g + 1) * 128]          # (tm, 128), vreg-aligned
        hs = hsqb_ref[pl.ds(base + g, 1), :]          # (1, 128) f32
        lb = lab_ref[pl.ds(base + g, 1), :]           # (1, 128) i32
        # Monotone mining statistic m = 0.5*||b||^2 - <a, b>;
        # dist^2 = ||a||^2 + 2m is reconstructed only in the finalize branch.
        m = hs - col                                  # (tm, 128)
        same = ta == lb                               # (tm, 128)
        pos = jnp.where(same, m, _NEG_SENT)
        neg = jnp.where(same, _POS_SENT, m)
        pm = pos if pm is None else jnp.maximum(pm, pos)
        nm = neg if nm is None else jnp.minimum(nm, neg)

    # Lane-dense running update (pure VPU; no per-tile cross-lane reduce).
    pmax_ref[...] = jnp.maximum(pmax_ref[...], pm)
    nmin_ref[...] = jnp.minimum(nmin_ref[...], nm)

    @pl.when(j == pl.num_programs(1) - 1)
    def _finalize():
        sqa = sqa_ref[...]                                     # (tm, 1)
        m_ap = jnp.max(pmax_ref[...], axis=1, keepdims=True)   # one XLU reduce
        m_an = jnp.min(nmin_ref[...], axis=1, keepdims=True)
        # clamp(1e-12)+sqrt commutes with the monotone max/min mining, so this
        # exactly matches dist.clamp(min=1e-12).sqrt() applied before mining.
        d_ap = jnp.sqrt(jnp.maximum(sqa + 2.0 * m_ap, 1e-12))
        d_an = jnp.sqrt(jnp.maximum(sqa + 2.0 * m_an, 1e-12))
        hinge_ref[...] = jnp.maximum(d_ap - d_an + margin, 0.0)


def _round_up(x, m):
    return (x + m - 1) // m * m


def _pick_tiles(n):
    """Anchor tile tm, candidate tile tn (multiples of 128, tm % tn == 0)."""
    n128 = _round_up(max(n, 1), 128)
    if n128 >= 1024:
        return 512, 256
    if n128 >= 512:
        return 256, 256
    return 128, 128


def triplet_loss(inputs, targets, *, margin=0.3, mutual=False, bf16_gram=True,
                 anchor_tile=None, cand_tile=None):
    """inputs: (N, D) float, targets: (N,) int -> scalar float32 loss."""
    n, d = inputs.shape
    x = inputs.astype(jnp.float32)
    t = targets.astype(jnp.int32)

    tm, tn = _pick_tiles(n)
    if anchor_tile is not None:
        tm = int(anchor_tile)
    if cand_tile is not None:
        tn = int(cand_tile)
    assert tm % 8 == 0 and tn % 128 == 0, (tm, tn)

    d_pad = _round_up(d, 128)             # zero cols change neither Gram nor norms
    n_pad = _round_up(n, math.lcm(tm, tn))
    pad_n = n_pad - n
    pad_d = d_pad - d

    if pad_n or pad_d:
        x = jnp.pad(x, ((0, pad_n), (0, pad_d)))
    if pad_n:
        # Pad label is guaranteed distinct from every real label -> padded
        # candidates can never be mined as hard positives.
        pad_label = jnp.min(t) - 1
        t = jnp.concatenate(
            [t, jnp.broadcast_to(pad_label, (pad_n,)).astype(jnp.int32)])

    # Gram operands (bf16 halves feature DMA and roughly doubles-to-quadruples
    # MXU throughput); norms are taken from the rounded operands so dist^2 is
    # a clean perturbation (self-distance stays ~0 before the 1e-12 clamp).
    x_feat = x.astype(jnp.bfloat16) if bf16_gram else x
    x_feat_t = x_feat.T                                  # (d_pad, n_pad)
    xq = x_feat.astype(jnp.float32)
    sq = jnp.sum(xq * xq, axis=1)                        # (n_pad,) f32

    sq_col = sq[:, None]                                 # (n_pad, 1) anchor norms
    t_col = t[:, None]                                   # (n_pad, 1) anchor labels
    half_sq = jnp.where(jnp.arange(n_pad) < n, 0.5 * sq, _POS_SENT)
    hsq_rows = half_sq.reshape(n_pad // 128, 128)        # resident candidate table
    lab_rows = t.reshape(n_pad // 128, 128)

    num_i = n_pad // tm
    num_j = n_pad // tn
    feat_bytes = 2 if bf16_gram else 4

    grid_spec = pltpu.PrefetchScalarGridSpec(
        num_scalar_prefetch=0,
        grid=(num_i, num_j),
        in_specs=[
            pl.BlockSpec((tm, d_pad), lambda i, j: (i, 0)),        # anchor feats
            pl.BlockSpec((d_pad, tn), lambda i, j: (0, j)),        # cand feats^T
            pl.BlockSpec((tm, 1), lambda i, j: (i, 0)),            # anchor ||x||^2
            pl.BlockSpec((tm, 1), lambda i, j: (i, 0)),            # anchor labels
            pl.BlockSpec((n_pad // 128, 128), lambda i, j: (0, 0)),  # cand 0.5||x||^2
            pl.BlockSpec((n_pad // 128, 128), lambda i, j: (0, 0)),  # cand labels
        ],
        out_specs=pl.BlockSpec((tm, 1), lambda i, j: (i, 0)),
        scratch_shapes=[
            pltpu.VMEM((tm, 128), jnp.float32),   # running hard-positive max
            pltpu.VMEM((tm, 128), jnp.float32),   # running hard-negative min
        ],
    )

    # Explicit scoped-VMEM budget: double-buffered feature blocks + mining
    # scratch + epilogue temporaries, with headroom; clamped v7x-safe (64 MiB).
    vmem_bytes = (2 * tm * d_pad * feat_bytes + 2 * d_pad * tn * feat_bytes
                  + 2 * tm * 128 * 4 + tm * tn * 4 + 4 * n_pad * 4)
    vmem_limit = int(min(max(2 * vmem_bytes, 32 << 20), 48 << 20))

    cost = pl.CostEstimate(
        flops=2 * n_pad * n_pad * d_pad,
        transcendentals=2 * n_pad,
        # anchors stream once (resident across j); candidates stream num_i times
        bytes_accessed=int((num_i + 1) * n_pad * d_pad * feat_bytes + 16 * n_pad),
    )

    hinge = pl.pallas_call(
        functools.partial(_triplet_kernel, margin=float(margin)),
        out_shape=jax.ShapeDtypeStruct((n_pad, 1), jnp.float32),
        grid_spec=grid_spec,
        compiler_params=pltpu.CompilerParams(
            dimension_semantics=("parallel", "arbitrary"),
            vmem_limit_bytes=vmem_limit),
        cost_estimate=cost,
    )(x_feat, x_feat_t, sq_col, t_col, hsq_rows, lab_rows)

    loss = jnp.sum(hinge[:n, 0]) / jnp.float32(n)
    if mutual:
        # TODO(synk): mutual_flag=True also returns the full (N, N) distance
        # matrix; the tiled kernel never materializes it, so only loss is
        # returned here.
        return loss
    return loss


def _reference_loss(x, t, margin=0.3):
    x = x.astype(jnp.float32)
    sq = jnp.sum(x * x, axis=1, keepdims=True)
    gram = jnp.matmul(x, x.T, precision=jax.lax.Precision.HIGHEST)
    dist = jnp.sqrt(jnp.maximum(sq + sq.T - 2.0 * gram, 1e-12))
    mask = t[:, None] == t[None, :]
    ap = jnp.max(jnp.where(mask, dist, -jnp.inf), axis=1)
    an = jnp.min(jnp.where(mask, jnp.inf, dist), axis=1)
    return jnp.mean(jnp.maximum(ap - an + margin, 0.0))


if __name__ == "__main__":
    key = jax.random.PRNGKey(0)

    # Case 1: tiny batch, f32 Gram -> exact check of the mining / folding
    # logic on a single 128-padded tile (batch=8, feat_dim=32).
    k1, key = jax.random.split(key)
    x1 = jax.random.normal(k1, (8, 32), dtype=jnp.float32)
    t1 = jnp.array([0, 0, 1, 1, 2, 2, 3, 3], dtype=jnp.int32)
    loss1 = triplet_loss(x1, t1, bf16_gram=False)
    jax.block_until_ready(loss1)
    ref1 = _reference_loss(x1, t1)
    assert jnp.allclose(loss1, ref1, atol=1e-3, rtol=1e-3), (loss1, ref1)

    # Case 2: multi-tile + padded path (160 rows -> 2x2 grid of 128 tiles),
    # f32 Gram for a tight check of the running scratch and padding masking.
    k2, key = jax.random.split(key)
    x2 = jax.random.normal(k2, (160, 32), dtype=jnp.float32)
    t2 = (jnp.arange(160) % 8).astype(jnp.int32)
    loss2 = triplet_loss(x2, t2, bf16_gram=False)
    jax.block_until_ready(loss2)
    ref2 = _reference_loss(x2, t2)
    assert jnp.allclose(loss2, ref2, atol=1e-3, rtol=1e-3), (loss2, ref2)

    # Case 3: default bf16-Gram perf configuration; looser tolerance because
    # bf16 rounding can flip hard-example selection near ties.
    loss3 = triplet_loss(x2, t2)
    jax.block_until_ready(loss3)
    assert jnp.allclose(loss3, ref2, atol=5e-2, rtol=5e-2), (loss3, ref2)

    print("KERNEL_OK")
</pallas_src>

<mosaic_0001>
module attributes {stable_mosaic.version = 11 : i64} {
  func.func @_triplet_kernel(%arg0: i32, %arg1: i32, %arg2: memref<128x128xf32, #tpu.memory_space<vmem>>, %arg3: memref<128x128xf32, #tpu.memory_space<vmem>>, %arg4: memref<128x1xf32, #tpu.memory_space<vmem>>, %arg5: memref<128x1xi32, #tpu.memory_space<vmem>>, %arg6: memref<1x128xf32, #tpu.memory_space<vmem>>, %arg7: memref<1x128xi32, #tpu.memory_space<vmem>>, %arg8: memref<128x1xf32, #tpu.memory_space<vmem>>, %arg9: memref<128x128xf32, #tpu.memory_space<vmem>>, %arg10: memref<128x128xf32, #tpu.memory_space<vmem>>) attributes {dimension_semantics = [#tpu.dimension_semantics<parallel>, #tpu.dimension_semantics<arbitrary>], iteration_bounds = array<i64: 1, 1>, scalar_prefetch = 0 : i64, scratch_operands = 2 : i64, tpu.core_type = #tpu.core_type<tc>, window_params = [{transform_indices = @transform_0, window_bounds = array<i64: 128, 128>}, {transform_indices = @transform_1, window_bounds = array<i64: 128, 128>}, {transform_indices = @transform_2, window_bounds = array<i64: 128, 1>}, {transform_indices = @transform_3, window_bounds = array<i64: 128, 1>}, {pipeline_mode = #tpu.pipeline_mode<synchronous>, transform_indices = @transform_4, window_bounds = array<i64: 1, 128>}, {pipeline_mode = #tpu.pipeline_mode<synchronous>, transform_indices = @transform_5, window_bounds = array<i64: 1, 128>}, {transform_indices = @transform_6, window_bounds = array<i64: 128, 1>}]} {
    %c0_i32 = arith.constant 0 : i32
    %0 = arith.cmpi eq, %arg1, %c0_i32 : i32
    %1 = arith.extui %0 : i1 to i32
    %c0_i32_0 = arith.constant 0 : i32
    %2 = arith.cmpi ne, %1, %c0_i32_0 : i32
    scf.if %2 {
      %cst_22 = arith.constant -9.99999993E+36 : f32
      %32 = vector.broadcast %cst_22 : f32 to vector<128x128xf32>
      %c0_23 = arith.constant 0 : index
      %c0_24 = arith.constant 0 : index
      %33 = vector.load %arg9[%c0_23, %c0_24] : memref<128x128xf32, #tpu.memory_space<vmem>>, vector<128x128xf32>
      tpu.vector_store %arg9[%c0_23, %c0_24], %32 {strides = array<i32>} : memref<128x128xf32, #tpu.memory_space<vmem>>, vector<128x128xf32>,
      %cst_25 = arith.constant 9.99999993E+36 : f32
      %34 = vector.broadcast %cst_25 : f32 to vector<128x128xf32>
      %c0_26 = arith.constant 0 : index
      %c0_27 = arith.constant 0 : index
      %35 = vector.load %arg10[%c0_26, %c0_27] : memref<128x128xf32, #tpu.memory_space<vmem>>, vector<128x128xf32>
      tpu.vector_store %arg10[%c0_26, %c0_27], %34 {strides = array<i32>} : memref<128x128xf32, #tpu.memory_space<vmem>>, vector<128x128xf32>,
    } else {
    }
    %c0 = arith.constant 0 : index
    %c0_1 = arith.constant 0 : index
    %3 = vector.load %arg2[%c0, %c0_1] : memref<128x128xf32, #tpu.memory_space<vmem>>, vector<128x128xf32>
    %c0_2 = arith.constant 0 : index
    %c0_3 = arith.constant 0 : index
    %4 = vector.load %arg3[%c0_2, %c0_3] : memref<128x128xf32, #tpu.memory_space<vmem>>, vector<128x128xf32>
    %cst = arith.constant dense<0.000000e+00> : vector<128x128xf32>
    %5 = tpu.matmul %3, %4, %cst {dimension_numbers = #tpu.dot_dimension_numbers<[1], [0], [0], [1], [0, 0, 1, 1], [], []>} : vector<128x128xf32>, vector<128x128xf32>, vector<128x128xf32> -> vector<128x128xf32>
    %c1_i32 = arith.constant 1 : i32
    %6 = arith.muli %arg1, %c1_i32 : i32
    %c0_4 = arith.constant 0 : index
    %c0_5 = arith.constant 0 : index
    %7 = vector.load %arg5[%c0_4, %c0_5] : memref<128x1xi32, #tpu.memory_space<vmem>>, vector<128x1xi32>
    %c0_i32_6 = arith.constant 0 : i32
    %8 = arith.addi %6, %c0_i32_6 : i32
    %9 = arith.index_cast %8 : i32 to index
    %c0_7 = arith.constant 0 : index
    %10 = vector.load %arg6[%9, %c0_7] : memref<1x128xf32, #tpu.memory_space<vmem>>, vector<1x128xf32>
    %c0_i32_8 = arith.constant 0 : i32
    %11 = arith.addi %6, %c0_i32_8 : i32
    %12 = arith.index_cast %11 : i32 to index
    %c0_9 = arith.constant 0 : index
    %13 = vector.load %arg7[%12, %c0_9] : memref<1x128xi32, #tpu.memory_space<vmem>>, vector<1x128xi32>
    %14 = vector.broadcast %10 : vector<1x128xf32> to vector<128x128xf32>
    %15 = arith.subf %14, %5 : vector<128x128xf32>
    %16 = vector.broadcast %7 : vector<128x1xi32> to vector<128x128xi32>
    %17 = vector.broadcast %13 : vector<1x128xi32> to vector<128x128xi32>
    %18 = arith.cmpi eq, %16, %17 : vector<128x128xi32>
    %cst_10 = arith.constant -9.99999993E+36 : f32
    %19 = vector.broadcast %cst_10 : f32 to vector<128x128xf32>
    %20 = arith.select %18, %15, %19 : vector<128x128xi1>, vector<128x128xf32>
    %cst_11 = arith.constant 9.99999993E+36 : f32
    %21 = vector.broadcast %cst_11 : f32 to vector<128x128xf32>
    %22 = arith.select %18, %21, %15 : vector<128x128xi1>, vector<128x128xf32>
    %c0_12 = arith.constant 0 : index
    %c0_13 = arith.constant 0 : index
    %23 = vector.load %arg9[%c0_12, %c0_13] : memref<128x128xf32, #tpu.memory_space<vmem>>, vector<128x128xf32>
    %24 = arith.maximumf %23, %20 : vector<128x128xf32>
    %c0_14 = arith.constant 0 : index
    %c0_15 = arith.constant 0 : index
    %25 = vector.load %arg9[%c0_14, %c0_15] : memref<128x128xf32, #tpu.memory_space<vmem>>, vector<128x128xf32>
    tpu.vector_store %arg9[%c0_14, %c0_15], %24 {strides = array<i32>} : memref<128x128xf32, #tpu.memory_space<vmem>>, vector<128x128xf32>,
    %c0_16 = arith.constant 0 : index
    %c0_17 = arith.constant 0 : index
    %26 = vector.load %arg10[%c0_16, %c0_17] : memref<128x128xf32, #tpu.memory_space<vmem>>, vector<128x128xf32>
    %27 = arith.minimumf %26, %22 : vector<128x128xf32>
    %c0_18 = arith.constant 0 : index
    %c0_19 = arith.constant 0 : index
    %28 = vector.load %arg10[%c0_18, %c0_19] : memref<128x128xf32, #tpu.memory_space<vmem>>, vector<128x128xf32>
    tpu.vector_store %arg10[%c0_18, %c0_19], %27 {strides = array<i32>} : memref<128x128xf32, #tpu.memory_space<vmem>>, vector<128x128xf32>,
    %c0_i32_20 = arith.constant 0 : i32
    %29 = arith.cmpi eq, %arg1, %c0_i32_20 : i32
    %30 = arith.extui %29 : i1 to i32
    %c0_i32_21 = arith.constant 0 : i32
    %31 = arith.cmpi ne, %30, %c0_i32_21 : i32
    scf.if %31 {
      %c0_22 = arith.constant 0 : index
      %c0_23 = arith.constant 0 : index
      %32 = vector.load %arg4[%c0_22, %c0_23] : memref<128x1xf32, #tpu.memory_space<vmem>>, vector<128x1xf32>
      %c0_24 = arith.constant 0 : index
      %c0_25 = arith.constant 0 : index
      %33 = vector.load %arg9[%c0_24, %c0_25] : memref<128x128xf32, #tpu.memory_space<vmem>>, vector<128x128xf32>
      %cst_26 = arith.constant dense<0xFF800000> : vector<128xf32>
      %34 = vector.multi_reduction <maximumf>, %33, %cst_26 [1] : vector<128x128xf32> to vector<128xf32>
      %35 = vector.shape_cast %34 : vector<128xf32> to vector<128x1xf32>
      %c0_27 = arith.constant 0 : index
      %c0_28 = arith.constant 0 : index
      %36 = vector.load %arg10[%c0_27, %c0_28] : memref<128x128xf32, #tpu.memory_space<vmem>>, vector<128x128xf32>
      %cst_29 = arith.constant dense<0x7F800000> : vector<128xf32>
      %37 = vector.multi_reduction <minimumf>, %36, %cst_29 [1] : vector<128x128xf32> to vector<128xf32>
      %38 = vector.shape_cast %37 : vector<128xf32> to vector<128x1xf32>
      %cst_30 = arith.constant 2.000000e+00 : f32
      %39 = vector.broadcast %cst_30 : f32 to vector<128x1xf32>
      %40 = arith.mulf %39, %35 : vector<128x1xf32>
      %41 = arith.addf %32, %40 : vector<128x1xf32>
      %cst_31 = arith.constant 9.99999996E-13 : f32
      %42 = vector.broadcast %cst_31 : f32 to vector<128x1xf32>
      %43 = arith.maximumf %41, %42 : vector<128x1xf32>
      %44 = math.sqrt %43 : vector<128x1xf32>
      %cst_32 = arith.constant 2.000000e+00 : f32
      %45 = vector.broadcast %cst_32 : f32 to vector<128x1xf32>
      %46 = arith.mulf %45, %38 : vector<128x1xf32>
      %47 = arith.addf %32, %46 : vector<128x1xf32>
      %cst_33 = arith.constant 9.99999996E-13 : f32
      %48 = vector.broadcast %cst_33 : f32 to vector<128x1xf32>
      %49 = arith.maximumf %47, %48 : vector<128x1xf32>
      %50 = math.sqrt %49 : vector<128x1xf32>
      %51 = arith.subf %44, %50 : vector<128x1xf32>
      %cst_34 = arith.constant 3.000000e-01 : f32
      %52 = vector.broadcast %cst_34 : f32 to vector<128x1xf32>
      %53 = arith.addf %51, %52 : vector<128x1xf32>
      %cst_35 = arith.constant 0.000000e+00 : f32
      %54 = vector.broadcast %cst_35 : f32 to vector<128x1xf32>
      %55 = arith.maximumf %53, %54 : vector<128x1xf32>
      %c0_36 = arith.constant 0 : index
      %c0_37 = arith.constant 0 : index
      %56 = vector.load %arg8[%c0_36, %c0_37] : memref<128x1xf32, #tpu.memory_space<vmem>>, vector<128x1xf32>
      tpu.vector_store %arg8[%c0_36, %c0_37], %55 {strides = array<i32>} : memref<128x1xf32, #tpu.memory_space<vmem>>, vector<128x1xf32>,
    } else {
    }
    return
  }
  func.func @transform_0(%arg0: i32, %arg1: i32) -> (i32, i32) {
    %c0_i32 = arith.constant 0 : i32
    %c0_i32_0 = arith.constant 0 : i32
    return %arg0, %c0_i32 : i32, i32
  }
  func.func @transform_1(%arg0: i32, %arg1: i32) -> (i32, i32) {
    %c0_i32 = arith.constant 0 : i32
    %c0_i32_0 = arith.constant 0 : i32
    return %c0_i32, %arg1 : i32, i32
  }
  func.func @transform_2(%arg0: i32, %arg1: i32) -> (i32, i32) {
    %c0_i32 = arith.constant 0 : i32
    %c0_i32_0 = arith.constant 0 : i32
    return %arg0, %c0_i32 : i32, i32
  }
  func.func @transform_3(%arg0: i32, %arg1: i32) -> (i32, i32) {
    %c0_i32 = arith.constant 0 : i32
    %c0_i32_0 = arith.constant 0 : i32
    return %arg0, %c0_i32 : i32, i32
  }
  func.func @transform_4(%arg0: i32, %arg1: i32) -> (i32, i32) {
    %c0_i32 = arith.constant 0 : i32
    %c0_i32_0 = arith.constant 0 : i32
    %c0_i32_1 = arith.constant 0 : i32
    return %c0_i32, %c0_i32_0 : i32, i32
  }
  func.func @transform_5(%arg0: i32, %arg1: i32) -> (i32, i32) {
    %c0_i32 = arith.constant 0 : i32
    %c0_i32_0 = arith.constant 0 : i32
    %c0_i32_1 = arith.constant 0 : i32
    return %c0_i32, %c0_i32_0 : i32, i32
  }
  func.func @transform_6(%arg0: i32, %arg1: i32) -> (i32, i32) {
    %c0_i32 = arith.constant 0 : i32
    %c0_i32_0 = arith.constant 0 : i32
    return %arg0, %c0_i32 : i32, i32
  }
}

</mosaic_0001>

<llo_original>
// kernel: tpu_custom_call.1
$region0: #{tpu_custom_call.1}
  #allocation0 [shape = 'u32[]', space=smem, size = 0x4, offset = 0x4, fixed_abs, tag = 'smem constant byte address 0x4 - core index']
  #allocation1 [shape = 'u32[144,128]{1,0:T(1,128)}', space=vmem, size = 0x12000, scoped, tag = 'internal scratch']
  #allocation2 [shape = 'f32[128,128]{1,0:T(8,128)}', space=vmem, size = 0x10000, scoped, tag = 'scratch operand']
  #allocation3 [shape = 'f32[128,128]{1,0:T(8,128)}', space=vmem, size = 0x10000, scoped, tag = 'scratch operand']
  %s0 = inlined_call_operand.vmem [shape: f32[128,128], index: 0, kind: input, shape index: {}]
  %s1 = inlined_call_operand.vmem [shape: f32[128,128], index: 1, kind: input, shape index: {}]
  %s2 = inlined_call_operand.vmem [shape: f32[128,1], index: 2, kind: input, shape index: {}]
  %s3 = inlined_call_operand.vmem [shape: s32[128,1], index: 3, kind: input, shape index: {}]
  %s4 = inlined_call_operand.vmem [shape: f32[1,128], index: 4, kind: input, shape index: {}]
  %s5 = inlined_call_operand.vmem [shape: s32[1,128], index: 5, kind: input, shape index: {}]
  %s6 = inlined_call_operand.vmem [shape: f32[128,1], index: 6, kind: output, shape index: {}]
  %s7 = sld [smem:[#allocation0]]
  $region42: #{tpu_custom_call.1} parent=0
    _
  %s9 = ssub.s32 1, %s7
  %s10 = scalar_select 0, %s9, %s7
  // Predicated region
  $region2: #{tpu_custom_call.1} parent=0 // pred_check
    _
  $region3: #{tpu_custom_call.1} parent=0 // pred_check_branch
    %12 = sbr.rel (0) target = $region5
  $region4: #{tpu_custom_call.1} parent=0 // pred_region
    _
  $region5: #{tpu_custom_call.1} parent=0 // pred_fallthru
    _
  // Predicated region
  $region6: #{tpu_custom_call.1} parent=0 // pred_check
    _
  $region7: #{tpu_custom_call.1} parent=0 // pred_check_branch
    %14 = sbr.rel (0) target = $region9
  $region8: #{tpu_custom_call.1} parent=0 // pred_region
    _
  $region9: #{tpu_custom_call.1} parent=0 // pred_fallthru
    _
  // Predicated region
  $region10: #{tpu_custom_call.1} parent=0 // pred_check
    _
  $region11: #{tpu_custom_call.1} parent=0 // pred_check_branch
    %16 = sbr.rel (0) target = $region13
  $region12: #{tpu_custom_call.1} parent=0 // pred_region
    _
  $region13: #{tpu_custom_call.1} parent=0 // pred_fallthru
    _
  // Predicated region
  $region14: #{tpu_custom_call.1} parent=0 // pred_check
    _
  $region15: #{tpu_custom_call.1} parent=0 // pred_check_branch
    %18 = sbr.rel (0) target = $region17
  $region16: #{tpu_custom_call.1} parent=0 // pred_region
    _
  $region17: #{tpu_custom_call.1} parent=0 // pred_fallthru
    _
  // Predicated region
  $region18: #{tpu_custom_call.1} parent=0 // pred_check
    _
  $region19: #{tpu_custom_call.1} parent=0 // pred_check_branch
    %20 = sbr.rel (0) target = $region21
  $region20: #{tpu_custom_call.1} parent=0 // pred_region
    _
  $region21: #{tpu_custom_call.1} parent=0 // pred_fallthru
    _
  // Predicated region
  $region22: #{tpu_custom_call.1} parent=0 // pred_check
    _
  $region23: #{tpu_custom_call.1} parent=0 // pred_check_branch
    %22 = sbr.rel (0) target = $region25
  $region24: #{tpu_custom_call.1} parent=0 // pred_region
    _
  $region25: #{tpu_custom_call.1} parent=0 // pred_fallthru
    _
  %p23 = scmp.eq.s32.totalorder 0, 0
  // Predicated region
  $region26: #{tpu_custom_call.1} parent=0 // pred_check
    %p24 = pneg %p23
  $region27: #{tpu_custom_call.1} parent=0 // pred_check_branch
    %26 = sbr.rel (%p24) target = $region29
  $region28: #{tpu_custom_call.1} parent=0 // pred_region
    %27 = vst [vmem:[#allocation2] sm:$0xff] -1e+37
    %28 = vst [vmem:[#allocation2 + $0x8] sm:$0xff] -1e+37
    %29 = vst [vmem:[#allocation2 + $0x10] sm:$0xff] -1e+37
    %30 = vst [vmem:[#allocation2 + $0x18] sm:$0xff] -1e+37
    %31 = vst [vmem:[#allocation2 + $0x20] sm:$0xff] -1e+37
    %32 = vst [vmem:[#allocation2 + $0x28] sm:$0xff] -1e+37
    %33 = vst [vmem:[#allocation2 + $0x30] sm:$0xff] -1e+37
    %34 = vst [vmem:[#allocation2 + $0x38] sm:$0xff] -1e+37
    %35 = vst [vmem:[#allocation2 + $0x40] sm:$0xff] -1e+37
    %36 = vst [vmem:[#allocation2 + $0x48] sm:$0xff] -1e+37
    %37 = vst [vmem:[#allocation2 + $0x50] sm:$0xff] -1e+37
    %38 = vst [vmem:[#allocation2 + $0x58] sm:$0xff] -1e+37
    %39 = vst [vmem:[#allocation2 + $0x60] sm:$0xff] -1e+37
    %40 = vst [vmem:[#allocation2 + $0x68] sm:$0xff] -1e+37
    %41 = vst [vmem:[#allocation2 + $0x70] sm:$0xff] -1e+37
    %42 = vst [vmem:[#allocation2 + $0x78] sm:$0xff] -1e+37
    %43 = vst [vmem:[#allocation3] sm:$0xff] 1e+37
    %44 = vst [vmem:[#allocation3 + $0x8] sm:$0xff] 1e+37
    %45 = vst [vmem:[#allocation3 + $0x10] sm:$0xff] 1e+37
    %46 = vst [vmem:[#allocation3 + $0x18] sm:$0xff] 1e+37
    %47 = vst [vmem:[#allocation3 + $0x20] sm:$0xff] 1e+37
    %48 = vst [vmem:[#allocation3 + $0x28] sm:$0xff] 1e+37
    %49 = vst [vmem:[#allocation3 + $0x30] sm:$0xff] 1e+37
    %50 = vst [vmem:[#allocation3 + $0x38] sm:$0xff] 1e+37
    %51 = vst [vmem:[#allocation3 + $0x40] sm:$0xff] 1e+37
    %52 = vst [vmem:[#allocation3 + $0x48] sm:$0xff] 1e+37
    %53 = vst [vmem:[#allocation3 + $0x50] sm:$0xff] 1e+37
    %54 = vst [vmem:[#allocation3 + $0x58] sm:$0xff] 1e+37
    %55 = vst [vmem:[#allocation3 + $0x60] sm:$0xff] 1e+37
    %56 = vst [vmem:[#allocation3 + $0x68] sm:$0xff] 1e+37
    %57 = vst [vmem:[#allocation3 + $0x70] sm:$0xff] 1e+37
    %58 = vst [vmem:[#allocation3 + $0x78] sm:$0xff] 1e+37
  $region29: #{tpu_custom_call.1} parent=0 // pred_fallthru
    _
  %v59 = vld [vmem:[%s0] sm:$0xff]
  %v60 = vld [vmem:[%s0 + $0x8] sm:$0xff]
  %v61 = vld [vmem:[%s0 + $0x10] sm:$0xff]
  %v62 = vld [vmem:[%s0 + $0x18] sm:$0xff]
  %v63 = vld [vmem:[%s0 + $0x20] sm:$0xff]
  %v64 = vld [vmem:[%s0 + $0x28] sm:$0xff]
  %v65 = vld [vmem:[%s0 + $0x30] sm:$0xff]
  %v66 = vld [vmem:[%s0 + $0x38] sm:$0xff]
  %v67 = vld [vmem:[%s0 + $0x40] sm:$0xff]
  %v68 = vld [vmem:[%s0 + $0x48] sm:$0xff]
  %v69 = vld [vmem:[%s0 + $0x50] sm:$0xff]
  %v70 = vld [vmem:[%s0 + $0x58] sm:$0xff]
  %v71 = vld [vmem:[%s0 + $0x60] sm:$0xff]
  %v72 = vld [vmem:[%s0 + $0x68] sm:$0xff]
  %v73 = vld [vmem:[%s0 + $0x70] sm:$0xff]
  %v74 = vld [vmem:[%s0 + $0x78] sm:$0xff]
  %v75 = vld [vmem:[%s1] sm:$0xff]
  %v76 = vld [vmem:[%s1 + $0x8] sm:$0xff]
  %v77 = vld [vmem:[%s1 + $0x10] sm:$0xff]
  %v78 = vld [vmem:[%s1 + $0x18] sm:$0xff]
  %v79 = vld [vmem:[%s1 + $0x20] sm:$0xff]
  %v80 = vld [vmem:[%s1 + $0x28] sm:$0xff]
  %v81 = vld [vmem:[%s1 + $0x30] sm:$0xff]
  %v82 = vld [vmem:[%s1 + $0x38] sm:$0xff]
  %v83 = vld [vmem:[%s1 + $0x40] sm:$0xff]
  %v84 = vld [vmem:[%s1 + $0x48] sm:$0xff]
  %v85 = vld [vmem:[%s1 + $0x50] sm:$0xff]
  %v86 = vld [vmem:[%s1 + $0x58] sm:$0xff]
  %v87 = vld [vmem:[%s1 + $0x60] sm:$0xff]
  %v88 = vld [vmem:[%s1 + $0x68] sm:$0xff]
  %v89 = vld [vmem:[%s1 + $0x70] sm:$0xff]
  %v90 = vld [vmem:[%s1 + $0x78] sm:$0xff]
  %91 = vmatprep.subr.mxu0 0.0
  %92 = vmatpush1.msra.mxu0 %v75
  %93 = vmatprep.subr.mxu0 0.0
  %94 = vmatpush1.msra.mxu0 %v76
  %95 = vmatprep.subr.mxu0 0.0
  %96 = vmatpush1.msra.mxu0 %v77
  %97 = vmatprep.subr.mxu0 0.0
  %98 = vmatpush1.msra.mxu0 %v78
  %99 = vmatprep.subr.mxu0 0.0
  %100 = vmatpush1.msra.mxu0 %v79
  %101 = vmatprep.subr.mxu0 0.0
  %102 = vmatpush1.msra.mxu0 %v80
  %103 = vmatprep.subr.mxu0 0.0
  %104 = vmatpush1.msra.mxu0 %v81
  %105 = vmatprep.subr.mxu0 0.0
  %106 = vmatpush1.msra.mxu0 %v82
  %107 = vmatprep.subr.mxu0 0.0
  %108 = vmatpush1.msra.mxu0 %v83
  %109 = vmatprep.subr.mxu0 0.0
  %110 = vmatpush1.msra.mxu0 %v84
  %111 = vmatprep.subr.mxu0 0.0
  %112 = vmatpush1.msra.mxu0 %v85
  %113 = vmatprep.subr.mxu0 0.0
  %114 = vmatpush1.msra.mxu0 %v86
  %115 = vmatprep.subr.mxu0 0.0
  %116 = vmatpush1.msra.mxu0 %v87
  %117 = vmatprep.subr.mxu0 0.0
  %118 = vmatpush1.msra.mxu0 %v88
  %119 = vmatprep.subr.mxu0 0.0
  %120 = vmatpush1.msra.mxu0 %v89
  %121 = vmatprep.subr.mxu0 0.0
  %122 = vmatpush1.msra.mxu0 %v90
  %123 = vmatprep.subr.mxu0 0.0
  %124 = vmatpush1.msra.mxu0 0.0
  %125 = vmatprep.subr.mxu0 0.0
  %126 = vmatpush1.msra.mxu0 0.0
  %127 = vmatprep.subr.mxu0 0.0
  %128 = vmatpush1.msra.mxu0 0.0
  %129 = vmatprep.subr.mxu0 0.0
  %130 = vmatpush1.msra.mxu0 0.0
  %131 = vmatprep.subr.mxu0 0.0
  %132 = vmatpush1.msra.mxu0 0.0
  %133 = vmatprep.subr.mxu0 0.0
  %134 = vmatpush1.msra.mxu0 0.0
  %135 = vmatprep.subr.mxu0 0.0
  %136 = vmatpush1.msra.mxu0 0.0
  %137 = vmatprep.subr.mxu0 0.0
  %138 = vmatpush1.msra.mxu0 0.0
  %139 = vmatprep.subr.mxu0 0.0
  %140 = vmatpush1.msra.mxu0 0.0
  %141 = vmatprep.subr.mxu0 0.0
  %142 = vmatpush1.msra.mxu0 0.0
  %143 = vmatprep.subr.mxu0 0.0
  %144 = vmatpush1.msra.mxu0 0.0
  %145 = vmatprep.subr.mxu0 0.0
  %146 = vmatpush1.msra.mxu0 0.0
  %147 = vmatprep.subr.mxu0 0.0
  %148 = vmatpush1.msra.mxu0 0.0
  %149 = vmatprep.subr.mxu0 0.0
  %150 = vmatpush1.msra.mxu0 0.0
  %151 = vmatprep.subr.mxu0 0.0
  %152 = vmatpush1.msra.mxu0 0.0
  %153 = vmatprep.subr.mxu0 0.0
  %154 = vmatpush1.msra.mxu0 0.0
  %155 = vmatprep.mubr.f32.mxu0 0.0
  %156 = vmatmul.mubr.f32.gmra.mrb[0].mxu0 %v59
  %v157 = vpop.f32.mrb[0].mxu0
  %v158 = vadd.f32 0.0, %v157
  %v159 = vpop.f32.mrb[0].mxu0
  %160 = vmatprep.mubr.f32.mxu0 0.0
  %161 = vmatmul.mubr.f32.gmra.mrb[0].mxu0 %v60
  %v162 = vpop.f32.mrb[0].mxu0
  %v163 = vadd.f32 0.0, %v162
  %v164 = vpop.f32.mrb[0].mxu0
  %165 = vmatprep.mubr.f32.mxu0 0.0
  %166 = vmatmul.mubr.f32.gmra.mrb[0].mxu0 %v61
  %v167 = vpop.f32.mrb[0].mxu0
  %v168 = vadd.f32 0.0, %v167
  %v169 = vpop.f32.mrb[0].mxu0
  %170 = vmatprep.mubr.f32.mxu0 0.0
  %171 = vmatmul.mubr.f32.gmra.mrb[0].mxu0 %v62
  %v172 = vpop.f32.mrb[0].mxu0
  %v173 = vadd.f32 0.0, %v172
  %v174 = vpop.f32.mrb[0].mxu0
  %175 = vmatprep.mubr.f32.mxu0 0.0
  %176 = vmatmul.mubr.f32.gmra.mrb[0].mxu0 %v63
  %v177 = vpop.f32.mrb[0].mxu0
  %v178 = vadd.f32 0.0, %v177
  %v179 = vpop.f32.mrb[0].mxu0
  %180 = vmatprep.mubr.f32.mxu0 0.0
  %181 = vmatmul.mubr.f32.gmra.mrb[0].mxu0 %v64
  %v182 = vpop.f32.mrb[0].mxu0
  %v183 = vadd.f32 0.0, %v182
  %v184 = vpop.f32.mrb[0].mxu0
  %185 = vmatprep.mubr.f32.mxu0 0.0
  %186 = vmatmul.mubr.f32.gmra.mrb[0].mxu0 %v65
  %v187 = vpop.f32.mrb[0].mxu0
  %v188 = vadd.f32 0.0, %v187
  %v189 = vpop.f32.mrb[0].mxu0
  %190 = vmatprep.mubr.f32.mxu0 0.0
  %191 = vmatmul.mubr.f32.gmra.mrb[0].mxu0 %v66
  %v192 = vpop.f32.mrb[0].mxu0
  %v193 = vadd.f32 0.0, %v192
  %v194 = vpop.f32.mrb[0].mxu0
  %195 = vmatprep.mubr.f32.mxu0 0.0
  %196 = vmatmul.mubr.f32.gmra.mrb[0].mxu0 %v67
  %v197 = vpop.f32.mrb[0].mxu0
  %v198 = vadd.f32 0.0, %v197
  %v199 = vpop.f32.mrb[0].mxu0
  %200 = vmatprep.mubr.f32.mxu0 0.0
  %201 = vmatmul.mubr.f32.gmra.mrb[0].mxu0 %v68
  %v202 = vpop.f32.mrb[0].mxu0
  %v203 = vadd.f32 0.0, %v202
  %v204 = vpop.f32.mrb[0].mxu0
  %205 = vmatprep.mubr.f32.mxu0 0.0
  %206 = vmatmul.mubr.f32.gmra.mrb[0].mxu0 %v69
  %v207 = vpop.f32.mrb[0].mxu0
  %v208 = vadd.f32 0.0, %v207
  %v209 = vpop.f32.mrb[0].mxu0
  %210 = vmatprep.mubr.f32.mxu0 0.0
  %211 = vmatmul.mubr.f32.gmra.mrb[0].mxu0 %v70
  %v212 = vpop.f32.mrb[0].mxu0
  %v213 = vadd.f32 0.0, %v212
  %v214 = vpop.f32.mrb[0].mxu0
  %215 = vmatprep.mubr.f32.mxu0 0.0
  %216 = vmatmul.mubr.f32.gmra.mrb[0].mxu0 %v71
  %v217 = vpop.f32.mrb[0].mxu0
  %v218 = vadd.f32 0.0, %v217
  %v219 = vpop.f32.mrb[0].mxu0
  %220 = vmatprep.mubr.f32.mxu0 0.0
  %221 = vmatmul.mubr.f32.gmra.mrb[0].mxu0 %v72
  %v222 = vpop.f32.mrb[0].mxu0
  %v223 = vadd.f32 0.0, %v222
  %v224 = vpop.f32.mrb[0].mxu0
  %225 = vmatprep.mubr.f32.mxu0 0.0
  %226 = vmatmul.mubr.f32.gmra.mrb[0].mxu0 %v73
  %v227 = vpop.f32.mrb[0].mxu0
  %v228 = vadd.f32 0.0, %v227
  %v229 = vpop.f32.mrb[0].mxu0
  %230 = vmatprep.mubr.f32.mxu0 0.0
  %231 = vmatmul.mubr.f32.gmra.mrb[0].mxu0 %v74
  %v232 = vpop.f32.mrb[0].mxu0
  %v233 = vadd.f32 0.0, %v232
  %v234 = vpop.f32.mrb[0].mxu0
  %235 = vdwg.mxu0
  %v236 = vld [vmem:[%s3] sm:$0xff]
  %v237 = vld [vmem:[%s3 + $0x8] sm:$0xff]
  %v238 = vld [vmem:[%s3 + $0x10] sm:$0xff]
  %v239 = vld [vmem:[%s3 + $0x18] sm:$0xff]
  %v240 = vld [vmem:[%s3 + $0x20] sm:$0xff]
  %v241 = vld [vmem:[%s3 + $0x28] sm:$0xff]
  %v242 = vld [vmem:[%s3 + $0x30] sm:$0xff]
  %v243 = vld [vmem:[%s3 + $0x38] sm:$0xff]
  %v244 = vld [vmem:[%s3 + $0x40] sm:$0xff]
  %v245 = vld [vmem:[%s3 + $0x48] sm:$0xff]
  %v246 = vld [vmem:[%s3 + $0x50] sm:$0xff]
  %v247 = vld [vmem:[%s3 + $0x58] sm:$0xff]
  %v248 = vld [vmem:[%s3 + $0x60] sm:$0xff]
  %v249 = vld [vmem:[%s3 + $0x68] sm:$0xff]
  %v250 = vld [vmem:[%s3 + $0x70] sm:$0xff]
  %v251 = vld [vmem:[%s3 + $0x78] sm:$0xff]
  %v252 = vld [vmem:[%s4] sm:$0x1]
  %v253 = vld [vmem:[%s5] sm:$0x1]
  %v255 = vlaneseq
  %v256 = vshrl.u32 %v255, 7
  %v257 = vsub.s32 0, %v256
  %v258 = vrot.slane %v252, %v257
  %v260 = vsub.f32 %v258, %v158
  %v261 = vsub.f32 %v258, %v163
  %v262 = vsub.f32 %v258, %v168
  %v263 = vsub.f32 %v258, %v173
  %v264 = vsub.f32 %v258, %v178
  %v265 = vsub.f32 %v258, %v183
  %v266 = vsub.f32 %v258, %v188
  %v267 = vsub.f32 %v258, %v193
  %v268 = vsub.f32 %v258, %v198
  %v269 = vsub.f32 %v258, %v203
  %v270 = vsub.f32 %v258, %v208
  %v271 = vsub.f32 %v258, %v213
  %v272 = vsub.f32 %v258, %v218
  %v273 = vsub.f32 %v258, %v223
  %v274 = vsub.f32 %v258, %v228
  %v275 = vsub.f32 %v258, %v233
  %276 = vset.pattern.permute.xlu0 0
  %277 = vperm.xlu0 %276, %v236
  %v278 = vpop.permute.xlu0 %277
  %279 = vset.pattern.permute.xlu0 0
  %280 = vperm.xlu0 %279, %v237
  %v281 = vpop.permute.xlu0 %280
  %282 = vset.pattern.permute.xlu0 0
  %283 = vperm.xlu0 %282, %v238
  %v284 = vpop.permute.xlu0 %283
  %285 = vset.pattern.permute.xlu0 0
  %286 = vperm.xlu0 %285, %v239
  %v287 = vpop.permute.xlu0 %286
  %288 = vset.pattern.permute.xlu0 0
  %289 = vperm.xlu0 %288, %v240
  %v290 = vpop.permute.xlu0 %289
  %291 = vset.pattern.permute.xlu0 0
  %292 = vperm.xlu0 %291, %v241
  %v293 = vpop.permute.xlu0 %292
  %294 = vset.pattern.permute.xlu0 0
  %295 = vperm.xlu0 %294, %v242
  %v296 = vpop.permute.xlu0 %295
  %297 = vset.pattern.permute.xlu0 0
  %298 = vperm.xlu0 %297, %v243
  %v299 = vpop.permute.xlu0 %298
  %300 = vset.pattern.permute.xlu0 0
  %301 = vperm.xlu0 %300, %v244
  %v302 = vpop.permute.xlu0 %301
  %303 = vset.pattern.permute.xlu0 0
  %304 = vperm.xlu0 %303, %v245
  %v305 = vpop.permute.xlu0 %304
  %306 = vset.pattern.permute.xlu0 0
  %307 = vperm.xlu0 %306, %v246
  %v308 = vpop.permute.xlu0 %307
  %309 = vset.pattern.permute.xlu0 0
  %310 = vperm.xlu0 %309, %v247
  %v311 = vpop.permute.xlu0 %310
  %312 = vset.pattern.permute.xlu0 0
  %313 = vperm.xlu0 %312, %v248
  %v314 = vpop.permute.xlu0 %313
  %315 = vset.pattern.permute.xlu0 0
  %316 = vperm.xlu0 %315, %v249
  %v317 = vpop.permute.xlu0 %316
  %318 = vset.pattern.permute.xlu0 0
  %319 = vperm.xlu0 %318, %v250
  %v320 = vpop.permute.xlu0 %319
  %321 = vset.pattern.permute.xlu0 0
  %322 = vperm.xlu0 %321, %v251
  %v323 = vpop.permute.xlu0 %322
  %v324 = vlaneseq
  %v325 = vshrl.u32 %v324, 7
  %v326 = vsub.s32 0, %v325
  %v327 = vrot.slane %v253, %v326
  %vm328 = vcmp.eq.s32.totalorder %v278, %v327
  %vm329 = vcmp.eq.s32.totalorder %v281, %v327
  %vm330 = vcmp.eq.s32.totalorder %v284, %v327
  %vm331 = vcmp.eq.s32.totalorder %v287, %v327
  %vm332 = vcmp.eq.s32.totalorder %v290, %v327
  %vm333 = vcmp.eq.s32.totalorder %v293, %v327
  %vm334 = vcmp.eq.s32.totalorder %v296, %v327
  %vm335 = vcmp.eq.s32.totalorder %v299, %v327
  %vm336 = vcmp.eq.s32.totalorder %v302, %v327
  %vm337 = vcmp.eq.s32.totalorder %v305, %v327
  %vm338 = vcmp.eq.s32.totalorder %v308, %v327
  %vm339 = vcmp.eq.s32.totalorder %v311, %v327
  %vm340 = vcmp.eq.s32.totalorder %v314, %v327
  %vm341 = vcmp.eq.s32.totalorder %v317, %v327
  %vm342 = vcmp.eq.s32.totalorder %v320, %v327
  %vm343 = vcmp.eq.s32.totalorder %v323, %v327
  %v344 = vsel %vm328, %v260, -1e+37
  %v345 = vsel %vm329, %v261, -1e+37
  %v346 = vsel %vm330, %v262, -1e+37
  %v347 = vsel %vm331, %v263, -1e+37
  %v348 = vsel %vm332, %v264, -1e+37
  %v349 = vsel %vm333, %v265, -1e+37
  %v350 = vsel %vm334, %v266, -1e+37
  %v351 = vsel %vm335, %v267, -1e+37
  %v352 = vsel %vm336, %v268, -1e+37
  %v353 = vsel %vm337, %v269, -1e+37
  %v354 = vsel %vm338, %v270, -1e+37
  %v355 = vsel %vm339, %v271, -1e+37
  %v356 = vsel %vm340, %v272, -1e+37
  %v357 = vsel %vm341, %v273, -1e+37
  %v358 = vsel %vm342, %v274, -1e+37
  %v359 = vsel %vm343, %v275, -1e+37
  %v360 = vsel %vm328, 1e+37, %v260
  %v361 = vsel %vm329, 1e+37, %v261
  %v362 = vsel %vm330, 1e+37, %v262
  %v363 = vsel %vm331, 1e+37, %v263
  %v364 = vsel %vm332, 1e+37, %v264
  %v365 = vsel %vm333, 1e+37, %v265
  %v366 = vsel %vm334, 1e+37, %v266
  %v367 = vsel %vm335, 1e+37, %v267
  %v368 = vsel %vm336, 1e+37, %v268
  %v369 = vsel %vm337, 1e+37, %v269
  %v370 = vsel %vm338, 1e+37, %v270
  %v371 = vsel %vm339, 1e+37, %v271
  %v372 = vsel %vm340, 1e+37, %v272
  %v373 = vsel %vm341, 1e+37, %v273
  %v374 = vsel %vm342, 1e+37, %v274
  %v375 = vsel %vm343, 1e+37, %v275
  %v376 = vld [vmem:[#allocation2] sm:$0xff]
  %v377 = vld [vmem:[#allocation2 + $0x8] sm:$0xff]
  %v378 = vld [vmem:[#allocation2 + $0x10] sm:$0xff]
  %v379 = vld [vmem:[#allocation2 + $0x18] sm:$0xff]
  %v380 = vld [vmem:[#allocation2 + $0x20] sm:$0xff]
  %v381 = vld [vmem:[#allocation2 + $0x28] sm:$0xff]
  %v382 = vld [vmem:[#allocation2 + $0x30] sm:$0xff]
  %v383 = vld [vmem:[#allocation2 + $0x38] sm:$0xff]
  %v384 = vld [vmem:[#allocation2 + $0x40] sm:$0xff]
  %v385 = vld [vmem:[#allocation2 + $0x48] sm:$0xff]
  %v386 = vld [vmem:[#allocation2 + $0x50] sm:$0xff]
  %v387 = vld [vmem:[#allocation2 + $0x58] sm:$0xff]
  %v388 = vld [vmem:[#allocation2 + $0x60] sm:$0xff]
  %v389 = vld [vmem:[#allocation2 + $0x68] sm:$0xff]
  %v390 = vld [vmem:[#allocation2 + $0x70] sm:$0xff]
  %v391 = vld [vmem:[#allocation2 + $0x78] sm:$0xff]
  %v392 = vmax.f32 %v376, %v344
  %v393 = vmax.f32 %v377, %v345
  %v394 = vmax.f32 %v378, %v346
  %v395 = vmax.f32 %v379, %v347
  %v396 = vmax.f32 %v380, %v348
  %v397 = vmax.f32 %v381, %v349
  %v398 = vmax.f32 %v382, %v350
  %v399 = vmax.f32 %v383, %v351
  %v400 = vmax.f32 %v384, %v352
  %v401 = vmax.f32 %v385, %v353
  %v402 = vmax.f32 %v386, %v354
  %v403 = vmax.f32 %v387, %v355
  %v404 = vmax.f32 %v388, %v356
  %v405 = vmax.f32 %v389, %v357
  %v406 = vmax.f32 %v390, %v358
  %v407 = vmax.f32 %v391, %v359
  %408 = vst [vmem:[#allocation2] sm:$0xff] %v392
  %409 = vst [vmem:[#allocation2 + $0x8] sm:$0xff] %v393
  %410 = vst [vmem:[#allocation2 + $0x10] sm:$0xff] %v394
  %411 = vst [vmem:[#allocation2 + $0x18] sm:$0xff] %v395
  %412 = vst [vmem:[#allocation2 + $0x20] sm:$0xff] %v396
  %413 = vst [vmem:[#allocation2 + $0x28] sm:$0xff] %v397
  %414 = vst [vmem:[#allocation2 + $0x30] sm:$0xff] %v398
  %415 = vst [vmem:[#allocation2 + $0x38] sm:$0xff] %v399
  %416 = vst [vmem:[#allocation2 + $0x40] sm:$0xff] %v400
  %417 = vst [vmem:[#allocation2 + $0x48] sm:$0xff] %v401
  %418 = vst [vmem:[#allocation2 + $0x50] sm:$0xff] %v402
  %419 = vst [vmem:[#allocation2 + $0x58] sm:$0xff] %v403
  %420 = vst [vmem:[#allocation2 + $0x60] sm:$0xff] %v404
  %421 = vst [vmem:[#allocation2 + $0x68] sm:$0xff] %v405
  %422 = vst [vmem:[#allocation2 + $0x70] sm:$0xff] %v406
  %423 = vst [vmem:[#allocation2 + $0x78] sm:$0xff] %v407
  %v424 = vld [vmem:[#allocation3] sm:$0xff]
  %v425 = vld [vmem:[#allocation3 + $0x8] sm:$0xff]
  %v426 = vld [vmem:[#allocation3 + $0x10] sm:$0xff]
  %v427 = vld [vmem:[#allocation3 + $0x18] sm:$0xff]
  %v428 = vld [vmem:[#allocation3 + $0x20] sm:$0xff]
  %v429 = vld [vmem:[#allocation3 + $0x28] sm:$0xff]
  %v430 = vld [vmem:[#allocation3 + $0x30] sm:$0xff]
  %v431 = vld [vmem:[#allocation3 + $0x38] sm:$0xff]
  %v432 = vld [vmem:[#allocation3 + $0x40] sm:$0xff]
  %v433 = vld [vmem:[#allocation3 + $0x48] sm:$0xff]
  %v434 = vld [vmem:[#allocation3 + $0x50] sm:$0xff]
  %v435 = vld [vmem:[#allocation3 + $0x58] sm:$0xff]
  %v436 = vld [vmem:[#allocation3 + $0x60] sm:$0xff]
  %v437 = vld [vmem:[#allocation3 + $0x68] sm:$0xff]
  %v438 = vld [vmem:[#allocation3 + $0x70] sm:$0xff]
  %v439 = vld [vmem:[#allocation3 + $0x78] sm:$0xff]
  %v440 = vmin.f32 %v424, %v360
  %v441 = vmin.f32 %v425, %v361
  %v442 = vmin.f32 %v426, %v362
  %v443 = vmin.f32 %v427, %v363
  %v444 = vmin.f32 %v428, %v364
  %v445 = vmin.f32 %v429, %v365
  %v446 = vmin.f32 %v430, %v366
  %v447 = vmin.f32 %v431, %v367
  %v448 = vmin.f32 %v432, %v368
  %v449 = vmin.f32 %v433, %v369
  %v450 = vmin.f32 %v434, %v370
  %v451 = vmin.f32 %v435, %v371
  %v452 = vmin.f32 %v436, %v372
  %v453 = vmin.f32 %v437, %v373
  %v454 = vmin.f32 %v438, %v374
  %v455 = vmin.f32 %v439, %v375
  %456 = vst [vmem:[#allocation3] sm:$0xff] %v440
  %457 = vst [vmem:[#allocation3 + $0x8] sm:$0xff] %v441
  %458 = vst [vmem:[#allocation3 + $0x10] sm:$0xff] %v442
  %459 = vst [vmem:[#allocation3 + $0x18] sm:$0xff] %v443
  %460 = vst [vmem:[#allocation3 + $0x20] sm:$0xff] %v444
  %461 = vst [vmem:[#allocation3 + $0x28] sm:$0xff] %v445
  %462 = vst [vmem:[#allocation3 + $0x30] sm:$0xff] %v446
  %463 = vst [vmem:[#allocation3 + $0x38] sm:$0xff] %v447
  %464 = vst [vmem:[#allocation3 + $0x40] sm:$0xff] %v448
  %465 = vst [vmem:[#allocation3 + $0x48] sm:$0xff] %v449
  %466 = vst [vmem:[#allocation3 + $0x50] sm:$0xff] %v450
  %467 = vst [vmem:[#allocation3 + $0x58] sm:$0xff] %v451
  %468 = vst [vmem:[#allocation3 + $0x60] sm:$0xff] %v452
  %469 = vst [vmem:[#allocation3 + $0x68] sm:$0xff] %v453
  %470 = vst [vmem:[#allocation3 + $0x70] sm:$0xff] %v454
  %471 = vst [vmem:[#allocation3 + $0x78] sm:$0xff] %v455
  // Predicated region
  $region30: #{tpu_custom_call.1} parent=0 // pred_check
    %p472 = pneg %p23
  $region31: #{tpu_custom_call.1} parent=0 // pred_check_branch
    %474 = sbr.rel (%p472) target = $region33
  $region32: #{tpu_custom_call.1} parent=0 // pred_region
    %v475 = vld [vmem:[%s2] sm:$0xff]
    %v476 = vld [vmem:[%s2 + $0x8] sm:$0xff]
    %v477 = vld [vmem:[%s2 + $0x10] sm:$0xff]
    %v478 = vld [vmem:[%s2 + $0x18] sm:$0xff]
    %v479 = vld [vmem:[%s2 + $0x20] sm:$0xff]
    %v480 = vld [vmem:[%s2 + $0x28] sm:$0xff]
    %v481 = vld [vmem:[%s2 + $0x30] sm:$0xff]
    %v482 = vld [vmem:[%s2 + $0x38] sm:$0xff]
    %v483 = vld [vmem:[%s2 + $0x40] sm:$0xff]
    %v484 = vld [vmem:[%s2 + $0x48] sm:$0xff]
    %v485 = vld [vmem:[%s2 + $0x50] sm:$0xff]
    %v486 = vld [vmem:[%s2 + $0x58] sm:$0xff]
    %v487 = vld [vmem:[%s2 + $0x60] sm:$0xff]
    %v488 = vld [vmem:[%s2 + $0x68] sm:$0xff]
    %v489 = vld [vmem:[%s2 + $0x70] sm:$0xff]
    %v490 = vld [vmem:[%s2 + $0x78] sm:$0xff]
    %v491 = vld [vmem:[#allocation2] sm:$0xff]
    %v492 = vld [vmem:[#allocation2 + $0x8] sm:$0xff]
    %v493 = vld [vmem:[#allocation2 + $0x10] sm:$0xff]
    %v494 = vld [vmem:[#allocation2 + $0x18] sm:$0xff]
    %v495 = vld [vmem:[#allocation2 + $0x20] sm:$0xff]
    %v496 = vld [vmem:[#allocation2 + $0x28] sm:$0xff]
    %v497 = vld [vmem:[#allocation2 + $0x30] sm:$0xff]
    %v498 = vld [vmem:[#allocation2 + $0x38] sm:$0xff]
    %v499 = vld [vmem:[#allocation2 + $0x40] sm:$0xff]
    %v500 = vld [vmem:[#allocation2 + $0x48] sm:$0xff]
    %v501 = vld [vmem:[#allocation2 + $0x50] sm:$0xff]
    %v502 = vld [vmem:[#allocation2 + $0x58] sm:$0xff]
    %v503 = vld [vmem:[#allocation2 + $0x60] sm:$0xff]
    %v504 = vld [vmem:[#allocation2 + $0x68] sm:$0xff]
    %v505 = vld [vmem:[#allocation2 + $0x70] sm:$0xff]
    %v506 = vld [vmem:[#allocation2 + $0x78] sm:$0xff]
    %507 = vmax.xlane.f32.xlu0 %v491
    %v508 = vpop.xlane.xlu0 %507
    %509 = vmax.xlane.f32.xlu0 %v492
    %v510 = vpop.xlane.xlu0 %509
    %511 = vmax.xlane.f32.xlu0 %v493
    %v512 = vpop.xlane.xlu0 %511
    %513 = vmax.xlane.f32.xlu0 %v494
    %v514 = vpop.xlane.xlu0 %513
    %515 = vmax.xlane.f32.xlu0 %v495
    %v516 = vpop.xlane.xlu0 %515
    %517 = vmax.xlane.f32.xlu0 %v496
    %v518 = vpop.xlane.xlu0 %517
    %519 = vmax.xlane.f32.xlu0 %v497
    %v520 = vpop.xlane.xlu0 %519
    %521 = vmax.xlane.f32.xlu0 %v498
    %v522 = vpop.xlane.xlu0 %521
    %523 = vmax.xlane.f32.xlu0 %v499
    %v524 = vpop.xlane.xlu0 %523
    %525 = vmax.xlane.f32.xlu0 %v500
    %v526 = vpop.xlane.xlu0 %525
    %527 = vmax.xlane.f32.xlu0 %v501
    %v528 = vpop.xlane.xlu0 %527
    %529 = vmax.xlane.f32.xlu0 %v502
    %v530 = vpop.xlane.xlu0 %529
    %531 = vmax.xlane.f32.xlu0 %v503
    %v532 = vpop.xlane.xlu0 %531
    %533 = vmax.xlane.f32.xlu0 %v504
    %v534 = vpop.xlane.xlu0 %533
    %535 = vmax.xlane.f32.xlu0 %v505
    %v536 = vpop.xlane.xlu0 %535
    %537 = vmax.xlane.f32.xlu0 %v506
    %v538 = vpop.xlane.xlu0 %537
    %v539 = vld [vmem:[#allocation3] sm:$0xff]
    %v540 = vld [vmem:[#allocation3 + $0x8] sm:$0xff]
    %v541 = vld [vmem:[#allocation3 + $0x10] sm:$0xff]
    %v542 = vld [vmem:[#allocation3 + $0x18] sm:$0xff]
    %v543 = vld [vmem:[#allocation3 + $0x20] sm:$0xff]
    %v544 = vld [vmem:[#allocation3 + $0x28] sm:$0xff]
    %v545 = vld [vmem:[#allocation3 + $0x30] sm:$0xff]
    %v546 = vld [vmem:[#allocation3 + $0x38] sm:$0xff]
    %v547 = vld [vmem:[#allocation3 + $0x40] sm:$0xff]
    %v548 = vld [vmem:[#allocation3 + $0x48] sm:$0xff]
    %v549 = vld [vmem:[#allocation3 + $0x50] sm:$0xff]
    %v550 = vld [vmem:[#allocation3 + $0x58] sm:$0xff]
    %v551 = vld [vmem:[#allocation3 + $0x60] sm:$0xff]
    %v552 = vld [vmem:[#allocation3 + $0x68] sm:$0xff]
    %v553 = vld [vmem:[#allocation3 + $0x70] sm:$0xff]
    %v554 = vld [vmem:[#allocation3 + $0x78] sm:$0xff]
    %555 = vmin.xlane.f32.xlu0 %v539
    %v556 = vpop.xlane.xlu0 %555
    %557 = vmin.xlane.f32.xlu0 %v540
    %v558 = vpop.xlane.xlu0 %557
    %559 = vmin.xlane.f32.xlu0 %v541
    %v560 = vpop.xlane.xlu0 %559
    %561 = vmin.xlane.f32.xlu0 %v542
    %v562 = vpop.xlane.xlu0 %561
    %563 = vmin.xlane.f32.xlu0 %v543
    %v564 = vpop.xlane.xlu0 %563
    %565 = vmin.xlane.f32.xlu0 %v544
    %v566 = vpop.xlane.xlu0 %565
    %567 = vmin.xlane.f32.xlu0 %v545
    %v568 = vpop.xlane.xlu0 %567
    %569 = vmin.xlane.f32.xlu0 %v546
    %v570 = vpop.xlane.xlu0 %569
    %571 = vmin.xlane.f32.xlu0 %v547
    %v572 = vpop.xlane.xlu0 %571
    %573 = vmin.xlane.f32.xlu0 %v548
    %v574 = vpop.xlane.xlu0 %573
    %575 = vmin.xlane.f32.xlu0 %v549
    %v576 = vpop.xlane.xlu0 %575
    %577 = vmin.xlane.f32.xlu0 %v550
    %v578 = vpop.xlane.xlu0 %577
    %579 = vmin.xlane.f32.xlu0 %v551
    %v580 = vpop.xlane.xlu0 %579
    %581 = vmin.xlane.f32.xlu0 %v552
    %v582 = vpop.xlane.xlu0 %581
    %583 = vmin.xlane.f32.xlu0 %v553
    %v584 = vpop.xlane.xlu0 %583
    %585 = vmin.xlane.f32.xlu0 %v554
    %v586 = vpop.xlane.xlu0 %585
    %v587 = vmul.f32 %v508, 2.0
    %v588 = vmul.f32 %v510, 2.0
    %v589 = vmul.f32 %v512, 2.0
    %v590 = vmul.f32 %v514, 2.0
    %v591 = vmul.f32 %v516, 2.0
    %v592 = vmul.f32 %v518, 2.0
    %v593 = vmul.f32 %v520, 2.0
    %v594 = vmul.f32 %v522, 2.0
    %v595 = vmul.f32 %v524, 2.0
    %v596 = vmul.f32 %v526, 2.0
    %v597 = vmul.f32 %v528, 2.0
    %v598 = vmul.f32 %v530, 2.0
    %v599 = vmul.f32 %v532, 2.0
    %v600 = vmul.f32 %v534, 2.0
    %v601 = vmul.f32 %v536, 2.0
    %v602 = vmul.f32 %v538, 2.0
    %v603 = vadd.f32 %v475, %v587
    %v604 = vadd.f32 %v476, %v588
    %v605 = vadd.f32 %v477, %v589
    %v606 = vadd.f32 %v478, %v590
    %v607 = vadd.f32 %v479, %v591
    %v608 = vadd.f32 %v480, %v592
    %v609 = vadd.f32 %v481, %v593
    %v610 = vadd.f32 %v482, %v594
    %v611 = vadd.f32 %v483, %v595
    %v612 = vadd.f32 %v484, %v596
    %v613 = vadd.f32 %v485, %v597
    %v614 = vadd.f32 %v486, %v598
    %v615 = vadd.f32 %v487, %v599
    %v616 = vadd.f32 %v488, %v600
    %v617 = vadd.f32 %v489, %v601
    %v618 = vadd.f32 %v490, %v602
    %v619 = vmax.f32 %v603, 1e-12
    %v620 = vmax.f32 %v604, 1e-12
    %v621 = vmax.f32 %v605, 1e-12
    %v622 = vmax.f32 %v606, 1e-12
    %v623 = vmax.f32 %v607, 1e-12
    %v624 = vmax.f32 %v608, 1e-12
    %v625 = vmax.f32 %v609, 1e-12
    %v626 = vmax.f32 %v610, 1e-12
    %v627 = vmax.f32 %v611, 1e-12
    %v628 = vmax.f32 %v612, 1e-12
    %v629 = vmax.f32 %v613, 1e-12
    %v630 = vmax.f32 %v614, 1e-12
    %v631 = vmax.f32 %v615, 1e-12
    %v632 = vmax.f32 %v616, 1e-12
    %v633 = vmax.f32 %v617, 1e-12
    %v634 = vmax.f32 %v618, 1e-12
    %v635 = vrsqrt.pop %v619
    %v636 = vmul.f32 %v619, %v635
    %vm637 = vcmp.eq.f32.partialorder %v619, inf
    %v638 = vsel %vm637, %v619, %v636
    %vm639 = vcmp.eq.f32.partialorder %v619, 0.0
    %v640 = vand.u32 %v619, 2147483648
    %v641 = vsel %vm639, %v640, %v638
    %v642 = vrsqrt.pop %v620
    %v643 = vmul.f32 %v620, %v642
    %vm644 = vcmp.eq.f32.partialorder %v620, inf
    %v645 = vsel %vm644, %v620, %v643
    %vm646 = vcmp.eq.f32.partialorder %v620, 0.0
    %v647 = vand.u32 %v620, 2147483648
    %v648 = vsel %vm646, %v647, %v645
    %v649 = vrsqrt.pop %v621
    %v650 = vmul.f32 %v621, %v649
    %vm651 = vcmp.eq.f32.partialorder %v621, inf
    %v652 = vsel %vm651, %v621, %v650
    %vm653 = vcmp.eq.f32.partialorder %v621, 0.0
    %v654 = vand.u32 %v621, 2147483648
    %v655 = vsel %vm653, %v654, %v652
    %v656 = vrsqrt.pop %v622
    %v657 = vmul.f32 %v622, %v656
    %vm658 = vcmp.eq.f32.partialorder %v622, inf
    %v659 = vsel %vm658, %v622, %v657
    %vm660 = vcmp.eq.f32.partialorder %v622, 0.0
    %v661 = vand.u32 %v622, 2147483648
    %v662 = vsel %vm660, %v661, %v659
    %v663 = vrsqrt.pop %v623
    %v664 = vmul.f32 %v623, %v663
    %vm665 = vcmp.eq.f32.partialorder %v623, inf
    %v666 = vsel %vm665, %v623, %v664
    %vm667 = vcmp.eq.f32.partialorder %v623, 0.0
    %v668 = vand.u32 %v623, 2147483648
    %v669 = vsel %vm667, %v668, %v666
    %v670 = vrsqrt.pop %v624
    %v671 = vmul.f32 %v624, %v670
    %vm672 = vcmp.eq.f32.partialorder %v624, inf
    %v673 = vsel %vm672, %v624, %v671
    %vm674 = vcmp.eq.f32.partialorder %v624, 0.0
    %v675 = vand.u32 %v624, 2147483648
    %v676 = vsel %vm674, %v675, %v673
    %v677 = vrsqrt.pop %v625
    %v678 = vmul.f32 %v625, %v677
    %vm679 = vcmp.eq.f32.partialorder %v625, inf
    %v680 = vsel %vm679, %v625, %v678
    %vm681 = vcmp.eq.f32.partialorder %v625, 0.0
    %v682 = vand.u32 %v625, 2147483648
    %v683 = vsel %vm681, %v682, %v680
    %v684 = vrsqrt.pop %v626
    %v685 = vmul.f32 %v626, %v684
    %vm686 = vcmp.eq.f32.partialorder %v626, inf
    %v687 = vsel %vm686, %v626, %v685
    %vm688 = vcmp.eq.f32.partialorder %v626, 0.0
    %v689 = vand.u32 %v626, 2147483648
    %v690 = vsel %vm688, %v689, %v687
    %v691 = vrsqrt.pop %v627
    %v692 = vmul.f32 %v627, %v691
    %vm693 = vcmp.eq.f32.partialorder %v627, inf
    %v694 = vsel %vm693, %v627, %v692
    %vm695 = vcmp.eq.f32.partialorder %v627, 0.0
    %v696 = vand.u32 %v627, 2147483648
    %v697 = vsel %vm695, %v696, %v694
    %v698 = vrsqrt.pop %v628
    %v699 = vmul.f32 %v628, %v698
    %vm700 = vcmp.eq.f32.partialorder %v628, inf
    %v701 = vsel %vm700, %v628, %v699
    %vm702 = vcmp.eq.f32.partialorder %v628, 0.0
    %v703 = vand.u32 %v628, 2147483648
    %v704 = vsel %vm702, %v703, %v701
    %v705 = vrsqrt.pop %v629
    %v706 = vmul.f32 %v629, %v705
    %vm707 = vcmp.eq.f32.partialorder %v629, inf
    %v708 = vsel %vm707, %v629, %v706
    %vm709 = vcmp.eq.f32.partialorder %v629, 0.0
    %v710 = vand.u32 %v629, 2147483648
    %v711 = vsel %vm709, %v710, %v708
    %v712 = vrsqrt.pop %v630
    %v713 = vmul.f32 %v630, %v712
    %vm714 = vcmp.eq.f32.partialorder %v630, inf
    %v715 = vsel %vm714, %v630, %v713
    %vm716 = vcmp.eq.f32.partialorder %v630, 0.0
    %v717 = vand.u32 %v630, 2147483648
    %v718 = vsel %vm716, %v717, %v715
    %v719 = vrsqrt.pop %v631
    %v720 = vmul.f32 %v631, %v719
    %vm721 = vcmp.eq.f32.partialorder %v631, inf
    %v722 = vsel %vm721, %v631, %v720
    %vm723 = vcmp.eq.f32.partialorder %v631, 0.0
    %v724 = vand.u32 %v631, 2147483648
    %v725 = vsel %vm723, %v724, %v722
    %v726 = vrsqrt.pop %v632
    %v727 = vmul.f32 %v632, %v726
    %vm728 = vcmp.eq.f32.partialorder %v632, inf
    %v729 = vsel %vm728, %v632, %v727
    %vm730 = vcmp.eq.f32.partialorder %v632, 0.0
    %v731 = vand.u32 %v632, 2147483648
    %v732 = vsel %vm730, %v731, %v729
    %v733 = vrsqrt.pop %v633
    %v734 = vmul.f32 %v633, %v733
    %vm735 = vcmp.eq.f32.partialorder %v633, inf
    %v736 = vsel %vm735, %v633, %v734
    %vm737 = vcmp.eq.f32.partialorder %v633, 0.0
    %v738 = vand.u32 %v633, 2147483648
    %v739 = vsel %vm737, %v738, %v736
    %v740 = vrsqrt.pop %v634
    %v741 = vmul.f32 %v634, %v740
    %vm742 = vcmp.eq.f32.partialorder %v634, inf
    %v743 = vsel %vm742, %v634, %v741
    %vm744 = vcmp.eq.f32.partialorder %v634, 0.0
    %v745 = vand.u32 %v634, 2147483648
    %v746 = vsel %vm744, %v745, %v743
    %v747 = vmul.f32 %v556, 2.0
    %v748 = vmul.f32 %v558, 2.0
    %v749 = vmul.f32 %v560, 2.0
    %v750 = vmul.f32 %v562, 2.0
    %v751 = vmul.f32 %v564, 2.0
    %v752 = vmul.f32 %v566, 2.0
    %v753 = vmul.f32 %v568, 2.0
    %v754 = vmul.f32 %v570, 2.0
    %v755 = vmul.f32 %v572, 2.0
    %v756 = vmul.f32 %v574, 2.0
    %v757 = vmul.f32 %v576, 2.0
    %v758 = vmul.f32 %v578, 2.0
    %v759 = vmul.f32 %v580, 2.0
    %v760 = vmul.f32 %v582, 2.0
    %v761 = vmul.f32 %v584, 2.0
    %v762 = vmul.f32 %v586, 2.0
    %v763 = vadd.f32 %v475, %v747
    %v764 = vadd.f32 %v476, %v748
    %v765 = vadd.f32 %v477, %v749
    %v766 = vadd.f32 %v478, %v750
    %v767 = vadd.f32 %v479, %v751
    %v768 = vadd.f32 %v480, %v752
    %v769 = vadd.f32 %v481, %v753
    %v770 = vadd.f32 %v482, %v754
    %v771 = vadd.f32 %v483, %v755
    %v772 = vadd.f32 %v484, %v756
    %v773 = vadd.f32 %v485, %v757
    %v774 = vadd.f32 %v486, %v758
    %v775 = vadd.f32 %v487, %v759
    %v776 = vadd.f32 %v488, %v760
    %v777 = vadd.f32 %v489, %v761
    %v778 = vadd.f32 %v490, %v762
    %v779 = vmax.f32 %v763, 1e-12
    %v780 = vmax.f32 %v764, 1e-12
    %v781 = vmax.f32 %v765, 1e-12
    %v782 = vmax.f32 %v766, 1e-12
    %v783 = vmax.f32 %v767, 1e-12
    %v784 = vmax.f32 %v768, 1e-12
    %v785 = vmax.f32 %v769, 1e-12
    %v786 = vmax.f32 %v770, 1e-12
    %v787 = vmax.f32 %v771, 1e-12
    %v788 = vmax.f32 %v772, 1e-12
    %v789 = vmax.f32 %v773, 1e-12
    %v790 = vmax.f32 %v774, 1e-12
    %v791 = vmax.f32 %v775, 1e-12
    %v792 = vmax.f32 %v776, 1e-12
    %v793 = vmax.f32 %v777, 1e-12
    %v794 = vmax.f32 %v778, 1e-12
    %v795 = vrsqrt.pop %v779
    %v796 = vmul.f32 %v779, %v795
    %vm797 = vcmp.eq.f32.partialorder %v779, inf
    %v798 = vsel %vm797, %v779, %v796
    %vm799 = vcmp.eq.f32.partialorder %v779, 0.0
    %v800 = vand.u32 %v779, 2147483648
    %v801 = vsel %vm799, %v800, %v798
    %v802 = vrsqrt.pop %v780
    %v803 = vmul.f32 %v780, %v802
    %vm804 = vcmp.eq.f32.partialorder %v780, inf
    %v805 = vsel %vm804, %v780, %v803
    %vm806 = vcmp.eq.f32.partialorder %v780, 0.0
    %v807 = vand.u32 %v780, 2147483648
    %v808 = vsel %vm806, %v807, %v805
    %v809 = vrsqrt.pop %v781
    %v810 = vmul.f32 %v781, %v809
    %vm811 = vcmp.eq.f32.partialorder %v781, inf
    %v812 = vsel %vm811, %v781, %v810
    %vm813 = vcmp.eq.f32.partialorder %v781, 0.0
    %v814 = vand.u32 %v781, 2147483648
    %v815 = vsel %vm813, %v814, %v812
    %v816 = vrsqrt.pop %v782
    %v817 = vmul.f32 %v782, %v816
    %vm818 = vcmp.eq.f32.partialorder %v782, inf
    %v819 = vsel %vm818, %v782, %v817
    %vm820 = vcmp.eq.f32.partialorder %v782, 0.0
    %v821 = vand.u32 %v782, 2147483648
    %v822 = vsel %vm820, %v821, %v819
    %v823 = vrsqrt.pop %v783
    %v824 = vmul.f32 %v783, %v823
    %vm825 = vcmp.eq.f32.partialorder %v783, inf
    %v826 = vsel %vm825, %v783, %v824
    %vm827 = vcmp.eq.f32.partialorder %v783, 0.0
    %v828 = vand.u32 %v783, 2147483648
    %v829 = vsel %vm827, %v828, %v826
    %v830 = vrsqrt.pop %v784
    %v831 = vmul.f32 %v784, %v830
    %vm832 = vcmp.eq.f32.partialorder %v784, inf
    %v833 = vsel %vm832, %v784, %v831
    %vm834 = vcmp.eq.f32.partialorder %v784, 0.0
    %v835 = vand.u32 %v784, 2147483648
    %v836 = vsel %vm834, %v835, %v833
    %v837 = vrsqrt.pop %v785
    %v838 = vmul.f32 %v785, %v837
    %vm839 = vcmp.eq.f32.partialorder %v785, inf
    %v840 = vsel %vm839, %v785, %v838
    %vm841 = vcmp.eq.f32.partialorder %v785, 0.0
    %v842 = vand.u32 %v785, 2147483648
    %v843 = vsel %vm841, %v842, %v840
    %v844 = vrsqrt.pop %v786
    %v845 = vmul.f32 %v786, %v844
    %vm846 = vcmp.eq.f32.partialorder %v786, inf
    %v847 = vsel %vm846, %v786, %v845
    %vm848 = vcmp.eq.f32.partialorder %v786, 0.0
    %v849 = vand.u32 %v786, 2147483648
    %v850 = vsel %vm848, %v849, %v847
    %v851 = vrsqrt.pop %v787
    %v852 = vmul.f32 %v787, %v851
    %vm853 = vcmp.eq.f32.partialorder %v787, inf
    %v854 = vsel %vm853, %v787, %v852
    %vm855 = vcmp.eq.f32.partialorder %v787, 0.0
    %v856 = vand.u32 %v787, 2147483648
    %v857 = vsel %vm855, %v856, %v854
    %v858 = vrsqrt.pop %v788
    %v859 = vmul.f32 %v788, %v858
    %vm860 = vcmp.eq.f32.partialorder %v788, inf
    %v861 = vsel %vm860, %v788, %v859
    %vm862 = vcmp.eq.f32.partialorder %v788, 0.0
    %v863 = vand.u32 %v788, 2147483648
    %v864 = vsel %vm862, %v863, %v861
    %v865 = vrsqrt.pop %v789
    %v866 = vmul.f32 %v789, %v865
    %vm867 = vcmp.eq.f32.partialorder %v789, inf
    %v868 = vsel %vm867, %v789, %v866
    %vm869 = vcmp.eq.f32.partialorder %v789, 0.0
    %v870 = vand.u32 %v789, 2147483648
    %v871 = vsel %vm869, %v870, %v868
    %v872 = vrsqrt.pop %v790
    %v873 = vmul.f32 %v790, %v872
    %vm874 = vcmp.eq.f32.partialorder %v790, inf
    %v875 = vsel %vm874, %v790, %v873
    %vm876 = vcmp.eq.f32.partialorder %v790, 0.0
    %v877 = vand.u32 %v790, 2147483648
    %v878 = vsel %vm876, %v877, %v875
    %v879 = vrsqrt.pop %v791
    %v880 = vmul.f32 %v791, %v879
    %vm881 = vcmp.eq.f32.partialorder %v791, inf
    %v882 = vsel %vm881, %v791, %v880
    %vm883 = vcmp.eq.f32.partialorder %v791, 0.0
    %v884 = vand.u32 %v791, 2147483648
    %v885 = vsel %vm883, %v884, %v882
    %v886 = vrsqrt.pop %v792
    %v887 = vmul.f32 %v792, %v886
    %vm888 = vcmp.eq.f32.partialorder %v792, inf
    %v889 = vsel %vm888, %v792, %v887
    %vm890 = vcmp.eq.f32.partialorder %v792, 0.0
    %v891 = vand.u32 %v792, 2147483648
    %v892 = vsel %vm890, %v891, %v889
    %v893 = vrsqrt.pop %v793
    %v894 = vmul.f32 %v793, %v893
    %vm895 = vcmp.eq.f32.partialorder %v793, inf
    %v896 = vsel %vm895, %v793, %v894
    %vm897 = vcmp.eq.f32.partialorder %v793, 0.0
    %v898 = vand.u32 %v793, 2147483648
    %v899 = vsel %vm897, %v898, %v896
    %v900 = vrsqrt.pop %v794
    %v901 = vmul.f32 %v794, %v900
    %vm902 = vcmp.eq.f32.partialorder %v794, inf
    %v903 = vsel %vm902, %v794, %v901
    %vm904 = vcmp.eq.f32.partialorder %v794, 0.0
    %v905 = vand.u32 %v794, 2147483648
    %v906 = vsel %vm904, %v905, %v903
    %v907 = vsub.f32 %v641, %v801
    %v908 = vsub.f32 %v648, %v808
    %v909 = vsub.f32 %v655, %v815
    %v910 = vsub.f32 %v662, %v822
    %v911 = vsub.f32 %v669, %v829
    %v912 = vsub.f32 %v676, %v836
    %v913 = vsub.f32 %v683, %v843
    %v914 = vsub.f32 %v690, %v850
    %v915 = vsub.f32 %v697, %v857
    %v916 = vsub.f32 %v704, %v864
    %v917 = vsub.f32 %v711, %v871
    %v918 = vsub.f32 %v718, %v878
    %v919 = vsub.f32 %v725, %v885
    %v920 = vsub.f32 %v732, %v892
    %v921 = vsub.f32 %v739, %v899
    %v922 = vsub.f32 %v746, %v906
    %v923 = vadd.f32 %v907, 0.3
    %v924 = vadd.f32 %v908, 0.3
    %v925 = vadd.f32 %v909, 0.3
    %v926 = vadd.f32 %v910, 0.3
    %v927 = vadd.f32 %v911, 0.3
    %v928 = vadd.f32 %v912, 0.3
    %v929 = vadd.f32 %v913, 0.3
    %v930 = vadd.f32 %v914, 0.3
    %v931 = vadd.f32 %v915, 0.3
    %v932 = vadd.f32 %v916, 0.3
    %v933 = vadd.f32 %v917, 0.3
    %v934 = vadd.f32 %v918, 0.3
    %v935 = vadd.f32 %v919, 0.3
    %v936 = vadd.f32 %v920, 0.3
    %v937 = vadd.f32 %v921, 0.3
    %v938 = vadd.f32 %v922, 0.3
    %v939 = vmax.f32 %v923, 0.0
    %v940 = vmax.f32 %v924, 0.0
    %v941 = vmax.f32 %v925, 0.0
    %v942 = vmax.f32 %v926, 0.0
    %v943 = vmax.f32 %v927, 0.0
    %v944 = vmax.f32 %v928, 0.0
    %v945 = vmax.f32 %v929, 0.0
    %v946 = vmax.f32 %v930, 0.0
    %v947 = vmax.f32 %v931, 0.0
    %v948 = vmax.f32 %v932, 0.0
    %v949 = vmax.f32 %v933, 0.0
    %v950 = vmax.f32 %v934, 0.0
    %v951 = vmax.f32 %v935, 0.0
    %v952 = vmax.f32 %v936, 0.0
    %v953 = vmax.f32 %v937, 0.0
    %v954 = vmax.f32 %v938, 0.0
    %vm955 = vcmask 7168
    %956 = vst.msk [vmem:[%s6] sm:$0xff] %vm955, %v939
    %957 = vst.msk [vmem:[%s6 + $0x8] sm:$0xff] %vm955, %v940
    %958 = vst.msk [vmem:[%s6 + $0x10] sm:$0xff] %vm955, %v941
    %959 = vst.msk [vmem:[%s6 + $0x18] sm:$0xff] %vm955, %v942
    %960 = vst.msk [vmem:[%s6 + $0x20] sm:$0xff] %vm955, %v943
    %961 = vst.msk [vmem:[%s6 + $0x28] sm:$0xff] %vm955, %v944
    %962 = vst.msk [vmem:[%s6 + $0x30] sm:$0xff] %vm955, %v945
    %963 = vst.msk [vmem:[%s6 + $0x38] sm:$0xff] %vm955, %v946
    %964 = vst.msk [vmem:[%s6 + $0x40] sm:$0xff] %vm955, %v947
    %965 = vst.msk [vmem:[%s6 + $0x48] sm:$0xff] %vm955, %v948
    %966 = vst.msk [vmem:[%s6 + $0x50] sm:$0xff] %vm955, %v949
    %967 = vst.msk [vmem:[%s6 + $0x58] sm:$0xff] %vm955, %v950
    %968 = vst.msk [vmem:[%s6 + $0x60] sm:$0xff] %vm955, %v951
    %969 = vst.msk [vmem:[%s6 + $0x68] sm:$0xff] %vm955, %v952
    %970 = vst.msk [vmem:[%s6 + $0x70] sm:$0xff] %vm955, %v953
    %971 = vst.msk [vmem:[%s6 + $0x78] sm:$0xff] %vm955, %v954
  $region33: #{tpu_custom_call.1} parent=0 // pred_fallthru
    _
  // Predicated region
  $region34: #{tpu_custom_call.1} parent=0 // pred_check
    _
  $region35: #{tpu_custom_call.1} parent=0 // pred_check_branch
    %973 = sbr.rel (0) target = $region37
  $region36: #{tpu_custom_call.1} parent=0 // pred_region
    _
  $region37: #{tpu_custom_call.1} parent=0 // pred_fallthru
    _
  // Predicated region
  $region38: #{tpu_custom_call.1} parent=0 // pred_check
    _
  $region39: #{tpu_custom_call.1} parent=0 // pred_check_branch
    %975 = sbr.rel (0) target = $region41
  $region40: #{tpu_custom_call.1} parent=0 // pred_region
    _
  $region41: #{tpu_custom_call.1} parent=0 // pred_fallthru
    _

</llo_original>
